<compile_context>
chip_gen: v5e
topology: v5e:2x2
jax: 0.10.0
libtpu: 0.0.40
codegen_flags: <defaults>
</compile_context>

<pallas_src>
import jax
import jax.numpy as jnp
from jax.experimental import pallas as pl
from jax.experimental.pallas import tpu as pltpu


def decoder_kernel(z_ref, w1_ref, b1_ref, w2_ref, b2_ref, o_ref):
    # Layer 1: (tm, 8) @ (8, 128).  K=8 => tiny; keep f32 for accuracy.
    h = jnp.dot(z_ref[...], w1_ref[...], preferred_element_type=jnp.float32)
    h = jnp.tanh(h + b1_ref[...])

    # Layer 2: (tm, 128) @ (128, 196).  bf16 operands, f32 MXU accumulation.
    y = jnp.dot(h.astype(jnp.bfloat16), w2_ref[...],
                preferred_element_type=jnp.float32)
    y = y + b2_ref[...]

    # Exact sigmoid via a single EUP tanh: sigmoid(y) = 0.5*tanh(y/2) + 0.5.
    o_ref[...] = (0.5 * jnp.tanh(0.5 * y) + 0.5).astype(o_ref.dtype)


def _round_up(x, m):
    return ((x + m - 1) // m) * m


def _cdiv(a, b):
    return -(-a // b)


def decoder_forward(z, w1, b1, w2, b2, *, tm=4096, out_dtype=jnp.float32):
    """sigmoid(tanh(z @ w1 + b1) @ w2 + b2), batch-tiled on TPU.

    z:  (B, 8)     f32
    w1: (8, 128)   f32   (in_features x out_features, i.e. W^T vs PyTorch)
    b1: (1, 128)   f32
    w2: (128, 196) f32
    b2: (1, 196)   f32
    returns (B, 196) out_dtype
    """
    B, K = z.shape
    H = w1.shape[1]
    N = w2.shape[1]

    # Balanced batch tile: multiple of 8 sublanes, <= tm, bounded pad waste.
    n_tiles = _cdiv(B, tm)
    tm_eff = _round_up(_cdiv(B, n_tiles), 8)
    B_pad = _round_up(B, tm_eff)
    zp = jnp.pad(z, ((0, B_pad - B), (0, 0))) if B_pad != B else z

    # bf16 copy of the layer-2 weights: DMA'd once, resident across the grid.
    # (Under jit this cast is hoisted / constant-folded; it is ~50 KiB anyway.)
    w2b = w2.astype(jnp.bfloat16)

    out = pl.pallas_call(
        decoder_kernel,
        out_shape=jax.ShapeDtypeStruct((B_pad, N), out_dtype),
        grid_spec=pltpu.PrefetchScalarGridSpec(
            num_scalar_prefetch=0,
            grid=(B_pad // tm_eff,),
            in_specs=[
                # z tile streams over the batch grid.
                pl.BlockSpec((tm_eff, K), lambda i: (i, 0)),
                # Weights / biases resident in VMEM across all grid steps.
                pl.BlockSpec((K, H), lambda i: (0, 0)),
                pl.BlockSpec((1, H), lambda i: (0, 0)),
                pl.BlockSpec((H, N), lambda i: (0, 0)),
                pl.BlockSpec((1, N), lambda i: (0, 0)),
            ],
            # N=196 is the full last dim of the output array => legal block.
            out_specs=pl.BlockSpec((tm_eff, N), lambda i: (i, 0)),
        ),
        compiler_params=pltpu.CompilerParams(
            dimension_semantics=("parallel",),
            vmem_limit_bytes=48 * 1024 * 1024,
        ),
    )(zp, w1, b1, w2b, b2)

    # Only a row slice when B was not a tile multiple (no column slice).
    return out[:B] if B_pad != B else out


def init_params(key):
    """Deterministic init mimicking nn.Linear's uniform(-1/sqrt(fan_in), +)."""
    k1, k2, k3, k4 = jax.random.split(key, 4)
    bound1 = 1.0 / jnp.sqrt(8.0)
    bound2 = 1.0 / jnp.sqrt(128.0)
    # Stored as (in_features, out_features) = W^T relative to PyTorch.
    w1 = jax.random.uniform(k1, (8, 128), jnp.float32, -bound1, bound1)
    b1 = jax.random.uniform(k2, (1, 128), jnp.float32, -bound1, bound1)
    w2 = jax.random.uniform(k3, (128, 196), jnp.float32, -bound2, bound2)
    b2 = jax.random.uniform(k4, (1, 196), jnp.float32, -bound2, bound2)
    return w1, b1, w2, b2


if __name__ == "__main__":
    key = jax.random.PRNGKey(0)
    k_params, k_input = jax.random.split(key)

    w1, b1, w2, b2 = init_params(k_params)

    B = 8  # small smoke-test batch; kernel tiles automatically for large B
    z = jax.random.normal(k_input, (B, 8), dtype=jnp.float32)

    out = decoder_forward(z, w1, b1, w2, b2)
    out = jax.block_until_ready(out)

    # Pure-JAX f32 reference (layer-2 bf16 operands => small tolerance).
    ref = jax.nn.sigmoid(jnp.tanh(z @ w1 + b1) @ w2 + b2)
    assert out.shape == (B, 196), out.shape
    assert jnp.allclose(out, ref, atol=2e-3, rtol=2e-3), "mismatch vs reference"

    print("KERNEL_OK")
</pallas_src>

<mosaic_0001>
module attributes {stable_mosaic.version = 11 : i64} {
  func.func @decoder_kernel(%arg0: i32, %arg1: memref<8x8xf32, #tpu.memory_space<vmem>>, %arg2: memref<8x128xf32, #tpu.memory_space<vmem>>, %arg3: memref<1x128xf32, #tpu.memory_space<vmem>>, %arg4: memref<128x196xbf16, #tpu.memory_space<vmem>>, %arg5: memref<1x196xf32, #tpu.memory_space<vmem>>, %arg6: memref<8x196xf32, #tpu.memory_space<vmem>>) attributes {dimension_semantics = [#tpu.dimension_semantics<parallel>], iteration_bounds = array<i64: 1>, scalar_prefetch = 0 : i64, scratch_operands = 0 : i64, tpu.core_type = #tpu.core_type<tc>, window_params = [{transform_indices = @transform_0, window_bounds = array<i64: 8, 8>}, {pipeline_mode = #tpu.pipeline_mode<synchronous>, transform_indices = @transform_1, window_bounds = array<i64: 8, 128>}, {pipeline_mode = #tpu.pipeline_mode<synchronous>, transform_indices = @transform_2, window_bounds = array<i64: 1, 128>}, {pipeline_mode = #tpu.pipeline_mode<synchronous>, transform_indices = @transform_3, window_bounds = array<i64: 128, 196>}, {pipeline_mode = #tpu.pipeline_mode<synchronous>, transform_indices = @transform_4, window_bounds = array<i64: 1, 196>}, {transform_indices = @transform_5, window_bounds = array<i64: 8, 196>}]} {
    %c0 = arith.constant 0 : index
    %c0_0 = arith.constant 0 : index
    %0 = vector.load %arg1[%c0, %c0_0] : memref<8x8xf32, #tpu.memory_space<vmem>>, vector<8x8xf32>
    %c0_1 = arith.constant 0 : index
    %c0_2 = arith.constant 0 : index
    %1 = vector.load %arg2[%c0_1, %c0_2] : memref<8x128xf32, #tpu.memory_space<vmem>>, vector<8x128xf32>
    %cst = arith.constant dense<0.000000e+00> : vector<8x128xf32>
    %2 = tpu.matmul %0, %1, %cst {dimension_numbers = #tpu.dot_dimension_numbers<[1], [0], [0], [1], [0, 0, 1, 1], [], []>} : vector<8x8xf32>, vector<8x128xf32>, vector<8x128xf32> -> vector<8x128xf32>
    %c0_3 = arith.constant 0 : index
    %c0_4 = arith.constant 0 : index
    %3 = vector.load %arg3[%c0_3, %c0_4] : memref<1x128xf32, #tpu.memory_space<vmem>>, vector<1x128xf32>
    %4 = vector.broadcast %3 : vector<1x128xf32> to vector<8x128xf32>
    %5 = arith.addf %2, %4 : vector<8x128xf32>
    %6 = math.tanh %5 : vector<8x128xf32>
    %7 = arith.truncf %6 : vector<8x128xf32> to vector<8x128xbf16>
    %c0_5 = arith.constant 0 : index
    %c0_6 = arith.constant 0 : index
    %8 = vector.load %arg4[%c0_5, %c0_6] : memref<128x196xbf16, #tpu.memory_space<vmem>>, vector<128x196xbf16>
    %cst_7 = arith.constant dense<0.000000e+00> : vector<8x196xf32>
    %9 = tpu.matmul %7, %8, %cst_7 {dimension_numbers = #tpu.dot_dimension_numbers<[1], [0], [0], [1], [0, 0, 1, 1], [], []>} : vector<8x128xbf16>, vector<128x196xbf16>, vector<8x196xf32> -> vector<8x196xf32>
    %c0_8 = arith.constant 0 : index
    %c0_9 = arith.constant 0 : index
    %10 = vector.load %arg5[%c0_8, %c0_9] : memref<1x196xf32, #tpu.memory_space<vmem>>, vector<1x196xf32>
    %11 = vector.broadcast %10 : vector<1x196xf32> to vector<8x196xf32>
    %12 = arith.addf %9, %11 : vector<8x196xf32>
    %cst_10 = arith.constant 5.000000e-01 : f32
    %13 = vector.broadcast %cst_10 : f32 to vector<8x196xf32>
    %14 = arith.mulf %13, %12 : vector<8x196xf32>
    %15 = math.tanh %14 : vector<8x196xf32>
    %cst_11 = arith.constant 5.000000e-01 : f32
    %16 = vector.broadcast %cst_11 : f32 to vector<8x196xf32>
    %17 = arith.mulf %16, %15 : vector<8x196xf32>
    %cst_12 = arith.constant 5.000000e-01 : f32
    %18 = vector.broadcast %cst_12 : f32 to vector<8x196xf32>
    %19 = arith.addf %17, %18 : vector<8x196xf32>
    %c0_13 = arith.constant 0 : index
    %c0_14 = arith.constant 0 : index
    %20 = vector.load %arg6[%c0_13, %c0_14] : memref<8x196xf32, #tpu.memory_space<vmem>>, vector<8x196xf32>
    tpu.vector_store %arg6[%c0_13, %c0_14], %19 {strides = array<i32>} : memref<8x196xf32, #tpu.memory_space<vmem>>, vector<8x196xf32>,
    return
  }
  func.func @transform_0(%arg0: i32) -> (i32, i32) {
    %c0_i32 = arith.constant 0 : i32
    %c0_i32_0 = arith.constant 0 : i32
    return %arg0, %c0_i32 : i32, i32
  }
  func.func @transform_1(%arg0: i32) -> (i32, i32) {
    %c0_i32 = arith.constant 0 : i32
    %c0_i32_0 = arith.constant 0 : i32
    %c0_i32_1 = arith.constant 0 : i32
    return %c0_i32, %c0_i32_0 : i32, i32
  }
  func.func @transform_2(%arg0: i32) -> (i32, i32) {
    %c0_i32 = arith.constant 0 : i32
    %c0_i32_0 = arith.constant 0 : i32
    %c0_i32_1 = arith.constant 0 : i32
    return %c0_i32, %c0_i32_0 : i32, i32
  }
  func.func @transform_3(%arg0: i32) -> (i32, i32) {
    %c0_i32 = arith.constant 0 : i32
    %c0_i32_0 = arith.constant 0 : i32
    %c0_i32_1 = arith.constant 0 : i32
    return %c0_i32, %c0_i32_0 : i32, i32
  }
  func.func @transform_4(%arg0: i32) -> (i32, i32) {
    %c0_i32 = arith.constant 0 : i32
    %c0_i32_0 = arith.constant 0 : i32
    %c0_i32_1 = arith.constant 0 : i32
    return %c0_i32, %c0_i32_0 : i32, i32
  }
  func.func @transform_5(%arg0: i32) -> (i32, i32) {
    %c0_i32 = arith.constant 0 : i32
    %c0_i32_0 = arith.constant 0 : i32
    return %arg0, %c0_i32 : i32, i32
  }
}

</mosaic_0001>

<llo_original>
// kernel: tpu_custom_call.1
$region0: #{tpu_custom_call.1}
  #allocation0 [shape = 'u32[]', space=smem, size = 0x4, offset = 0x4, fixed_abs, tag = 'smem constant byte address 0x4 - core index']
  #allocation1 [shape = 'u32[72,128]{1,0:T(1,128)}', space=vmem, size = 0x9000, scoped, tag = 'internal scratch']
  %s0 = inlined_call_operand.vmem [shape: f32[8,8], index: 0, kind: input, shape index: {}]
  %s1 = inlined_call_operand.vmem [shape: f32[8,128], index: 1, kind: input, shape index: {}]
  %s2 = inlined_call_operand.vmem [shape: f32[1,128], index: 2, kind: input, shape index: {}]
  %s3 = inlined_call_operand.vmem [shape: bf16[128,196], index: 3, kind: input, shape index: {}]
  %s4 = inlined_call_operand.vmem [shape: f32[1,196], index: 4, kind: input, shape index: {}]
  %s5 = inlined_call_operand.hbm [shape: f32[8,196], index: 5, kind: output, shape index: {}]
  %s6 = sld [smem:[#allocation0]]
  $region30: #{tpu_custom_call.1} parent=0
    _
  %s8 = ssub.s32 1, %s6
  %s9 = scalar_select 0, %s8, %s6
  $region1: #{tpu_custom_call.1} parent=0
    #allocation2 [shape = 'u8[8192]{0}', space=vmem, size = 0x2000, scoped, tag = 'output window, operand 0, single buffered']
    #allocation3 [shape = 's32[1]{0}', space=sflag, size = 0x4, scoped, tag = 'scoped memory for tpu_custom_call.1']
    %10 = vsyncpa [#allocation3], 0
    // Predicated region
    $region2: #{tpu_custom_call.1} parent=1 // pred_check
      _
    $region3: #{tpu_custom_call.1} parent=1 // pred_check_branch
      %12 = sbr.rel (0) target = $region5
    $region4: #{tpu_custom_call.1} parent=1 // pred_region
      _
    $region5: #{tpu_custom_call.1} parent=1 // pred_fallthru
      _
    // Predicated region
    $region6: #{tpu_custom_call.1} parent=1 // pred_check
      _
    $region7: #{tpu_custom_call.1} parent=1 // pred_check_branch
      %14 = sbr.rel (0) target = $region9
    $region8: #{tpu_custom_call.1} parent=1 // pred_region
      _
    $region9: #{tpu_custom_call.1} parent=1 // pred_fallthru
      _
    // Predicated region
    $region10: #{tpu_custom_call.1} parent=1 // pred_check
      _
    $region11: #{tpu_custom_call.1} parent=1 // pred_check_branch
      %16 = sbr.rel (0) target = $region13
    $region12: #{tpu_custom_call.1} parent=1 // pred_region
      _
    $region13: #{tpu_custom_call.1} parent=1 // pred_fallthru
      _
    // Predicated region
    $region14: #{tpu_custom_call.1} parent=1 // pred_check
      _
    $region15: #{tpu_custom_call.1} parent=1 // pred_check_branch
      %18 = sbr.rel (0) target = $region17
    $region16: #{tpu_custom_call.1} parent=1 // pred_region
      _
    $region17: #{tpu_custom_call.1} parent=1 // pred_fallthru
      _
    // Predicated region
    $region18: #{tpu_custom_call.1} parent=1 // pred_check
      _
    $region19: #{tpu_custom_call.1} parent=1 // pred_check_branch
      %20 = sbr.rel (0) target = $region21
    $region20: #{tpu_custom_call.1} parent=1 // pred_region
      _
    $region21: #{tpu_custom_call.1} parent=1 // pred_fallthru
      _
    %v21 = vld [vmem:[%s0] sm:$0xff]
    %v22 = vld [vmem:[%s1] sm:$0xff]
    %v23 = vld [vmem:[%s2] sm:$0x1]
    %v25 = vperm.slane %v23, 0
    %vm27 = vcmask 64512
    %v29 = vsel %vm27, %v21, 0
    %31 = vmatpush.msra.mxu0 0.0
    %32 = vmatpush.msra.mxu0 0.0
    %33 = vmatpush.msra.mxu0 0.0
    %34 = vmatpush.msra.mxu0 0.0
    %35 = vmatpush.msra.mxu0 0.0
    %36 = vmatpush.msra.mxu0 0.0
    %37 = vmatpush.msra.mxu0 0.0
    %38 = vmatpush.msra.mxu0 0.0
    %39 = vmatpush.msra.mxu0 0.0
    %40 = vmatpush.msra.mxu0 0.0
    %41 = vmatpush.msra.mxu0 0.0
    %42 = vmatpush.msra.mxu0 0.0
    %43 = vmatpush.msra.mxu0 0.0
    %44 = vmatpush.msra.mxu0 0.0
    %45 = vmatpush.msra.mxu0 0.0
    %46 = vmatpush.msra.mxu0 %v22
    %47 = vmatmul.f32.gmra.mxu0 %v29
    %v48 = vpop.f32.mrf.mxu0
    %v49 = vadd.f32 %v25, %v48
    %50 = vdwg.mxu0
    %v51 = vtanh.pop %v49
    %v52 = vpack.c.bf16 %v51, %v51
    %v53 = vld [vmem:[%s3] sm:$0xff]
    %v54 = vld [vmem:[%s3 + $0x8] sm:$0xff]
    %v55 = vld [vmem:[%s3 + $0x10] sm:$0xff]
    %v56 = vld [vmem:[%s3 + $0x18] sm:$0xff]
    %v57 = vld [vmem:[%s3 + $0x20] sm:$0xff]
    %v58 = vld [vmem:[%s3 + $0x28] sm:$0xff]
    %v59 = vld [vmem:[%s3 + $0x30] sm:$0xff]
    %v60 = vld [vmem:[%s3 + $0x38] sm:$0xff]
    %v61 = vld [vmem:[%s3 + $0x40] sm:$0xff]
    %v62 = vld [vmem:[%s3 + $0x48] sm:$0xff]
    %v63 = vld [vmem:[%s3 + $0x50] sm:$0xff]
    %v64 = vld [vmem:[%s3 + $0x58] sm:$0xff]
    %v65 = vld [vmem:[%s3 + $0x60] sm:$0xff]
    %v66 = vld [vmem:[%s3 + $0x68] sm:$0xff]
    %v67 = vld [vmem:[%s3 + $0x70] sm:$0xff]
    %v68 = vld [vmem:[%s3 + $0x78] sm:$0xff]
    %v69 = vld [vmem:[%s4] sm:$0x3]
    %v71 = vperm.slane %v69, 0
    %v72 = vperm.slane %v69, 1
    %v91 = vunpack.c.l.b16 %v53
    %v92 = vunpack.c.h.b16 %v53
    %v93 = vunpack.c.l.b16 %v54
    %v94 = vunpack.c.h.b16 %v54
    %v95 = vunpack.c.l.b16 %v55
    %v96 = vunpack.c.h.b16 %v55
    %v97 = vunpack.c.l.b16 %v56
    %v98 = vunpack.c.h.b16 %v56
    %v99 = vunpack.c.l.b16 %v57
    %v100 = vunpack.c.h.b16 %v57
    %v101 = vunpack.c.l.b16 %v58
    %v102 = vunpack.c.h.b16 %v58
    %v103 = vunpack.c.l.b16 %v59
    %v104 = vunpack.c.h.b16 %v59
    %v105 = vunpack.c.l.b16 %v60
    %v106 = vunpack.c.h.b16 %v60
    %v107 = vunpack.c.l.b16 %v61
    %v108 = vunpack.c.h.b16 %v61
    %v109 = vunpack.c.l.b16 %v62
    %v110 = vunpack.c.h.b16 %v62
    %v111 = vunpack.c.l.b16 %v63
    %v112 = vunpack.c.h.b16 %v63
    %v113 = vunpack.c.l.b16 %v64
    %v114 = vunpack.c.h.b16 %v64
    %v115 = vunpack.c.l.b16 %v65
    %v116 = vunpack.c.h.b16 %v65
    %v117 = vunpack.c.l.b16 %v66
    %v118 = vunpack.c.h.b16 %v66
    %v119 = vunpack.c.l.b16 %v67
    %v120 = vunpack.c.h.b16 %v67
    %v121 = vunpack.c.l.b16 %v68
    %v122 = vunpack.c.h.b16 %v68
    %v123 = vpack.c.b16 %v93, %v91
    %v124 = vpack.c.b16 %v94, %v92
    %v125 = vpack.c.b16 %v97, %v95
    %v126 = vpack.c.b16 %v98, %v96
    %v127 = vpack.c.b16 %v101, %v99
    %v128 = vpack.c.b16 %v102, %v100
    %v129 = vpack.c.b16 %v105, %v103
    %v130 = vpack.c.b16 %v106, %v104
    %v131 = vpack.c.b16 %v109, %v107
    %v132 = vpack.c.b16 %v110, %v108
    %v133 = vpack.c.b16 %v113, %v111
    %v134 = vpack.c.b16 %v114, %v112
    %v135 = vpack.c.b16 %v117, %v115
    %v136 = vpack.c.b16 %v118, %v116
    %v137 = vpack.c.b16 %v121, %v119
    %v138 = vpack.c.b16 %v122, %v120
    %155 = vmatpush.bf16.msra.mxu0 %v137
    %156 = vmatpush.bf16.msra.mxu0 %v135
    %157 = vmatpush.bf16.msra.mxu0 %v133
    %158 = vmatpush.bf16.msra.mxu0 %v131
    %159 = vmatpush.bf16.msra.mxu0 %v129
    %160 = vmatpush.bf16.msra.mxu0 %v127
    %161 = vmatpush.bf16.msra.mxu0 %v125
    %162 = vmatpush.bf16.msra.mxu0 %v123
    %163 = vmatmul.bf16.gmra.mxu0 %v52
    %v164 = vpop.f32.mrf.mxu0
    %v165 = vadd.f32 %v71, %v164
    %v166 = vpop.f32.mrf.mxu0
    %167 = vdwg.mxu0
    %168 = vmatpush.bf16.msra.mxu0 %v138
    %169 = vmatpush.bf16.msra.mxu0 %v136
    %170 = vmatpush.bf16.msra.mxu0 %v134
    %171 = vmatpush.bf16.msra.mxu0 %v132
    %172 = vmatpush.bf16.msra.mxu0 %v130
    %173 = vmatpush.bf16.msra.mxu0 %v128
    %174 = vmatpush.bf16.msra.mxu0 %v126
    %175 = vmatpush.bf16.msra.mxu0 %v124
    %176 = vmatmul.bf16.gmra.mxu0 %v52
    %v177 = vpop.f32.mrf.mxu0
    %v178 = vadd.f32 %v72, %v177
    %v179 = vpop.f32.mrf.mxu0
    %180 = vdwg.mxu0
    %v181 = vmul.f32 %v165, 0.5
    %v182 = vmul.f32 %v178, 0.5
    %v183 = vtanh.pop %v181
    %v184 = vtanh.pop %v182
    %v185 = vmul.f32 %v183, 0.5
    %v186 = vmul.f32 %v184, 0.5
    %v187 = vadd.f32 %v185, 0.5
    %v188 = vadd.f32 %v186, 0.5
    %189 = vst [vmem:[#allocation2] sm:$0xff] %v187
    %vm190 = vcmask 556032
    %191 = vst.msk [vmem:[#allocation2 + $0x8] sm:$0xff] %vm190, %v188
    // Predicated region
    $region22: #{tpu_custom_call.1} parent=1 // pred_check
      _
    $region23: #{tpu_custom_call.1} parent=1 // pred_check_branch
      %193 = sbr.rel (0) target = $region25
    $region24: #{tpu_custom_call.1} parent=1 // pred_region
      %195 = vsyncadd [#allocation3], 0
      %s197 = sshll.u32 [#allocation2], 4
      %s198 = int_to_ptr.vmem [resolvable:$true] %s197
      %s199 = sshll.u32 %s5, 4
      %s200 = int_to_ptr.hbm [resolvable:$true] %s199
      %202 = dma.vmem_to_hbm [thread:$0]  %s198, 256, %s200, [#allocation3]
    $region25: #{tpu_custom_call.1} parent=1 // pred_fallthru
      _
    // Predicated region
    $region26: #{tpu_custom_call.1} parent=1 // pred_check
      _
    $region27: #{tpu_custom_call.1} parent=1 // pred_check_branch
      %204 = sbr.rel (0) target = $region29
    $region28: #{tpu_custom_call.1} parent=1 // pred_region
      %206 = dma.done [#allocation3], 256
    $region29: #{tpu_custom_call.1} parent=1 // pred_fallthru
      _
    %207 = vsyncpa [#allocation3], 1

</llo_original>
